<compile_context>
chip_gen: v5e
topology: v5e:2x2
jax: 0.10.0
libtpu: 0.0.40
codegen_flags: <defaults>
</compile_context>

<pallas_src>
import jax
import jax.numpy as jnp
from jax import lax
from jax.experimental import pallas as pl
from jax.experimental.pallas import tpu as pltpu

# Full-precision f32 matmuls for both the XLA reference and the in-kernel
# dots, so the 1e-5 comparisons stay meaningful on real hardware.
jax.config.update("jax_default_matmul_precision", "highest")


def _cdiv(a, b):
    return (a + b - 1) // b


def _round_up(a, b):
    return _cdiv(a, b) * b


# Prefer >=2 "parallel" batch tiles once the batch is this big, so v7x's two
# TensorCores can split the grid; below this a single tile amortizes the
# ~0.35 us per-grid-step overhead best (v5e/v6e have one TC anyway).
_MIN_MEGACORE_ROWS = 256


def _choose_batch_tiles(B, batch_block, align):
    if B >= 2 * _MIN_MEGACORE_ROWS:
        grid_n = max(2, _cdiv(B, batch_block))
    else:
        grid_n = max(1, _cdiv(B, batch_block))
    bb = _round_up(_cdiv(B, grid_n), align)
    return bb, grid_n


# ---------------------------------------------------------------------------
# One-time parameter preprocessing (hoisted out of the per-eval path).
# ---------------------------------------------------------------------------
def prepare_params(params, *, time_augment=True,
                   compute_dtype=jnp.float32,
                   elementwise_dtype=jnp.float32):
    """params: [(W1, b1), ..., (Wk, bk), Wout], weights stored as [in, out].

    Returns (flat_params, cfg):
      flat_params: tuple of arrays handed straight to the kernels:
                     time_augment:  (W1x, w1t, b1, [Wi, bi]*, Wout)
                     otherwise:     (W1,       b1, [Wi, bi]*, Wout)
      cfg: static configuration baked into the kernel closures.
    """
    w_out = params[-1]
    hidden = params[:-1]
    n_hidden = len(hidden)
    nb_units = w_out.shape[0]
    out_feats = w_out.shape[1]

    (w1, b1) = hidden[0]
    flat = []
    if time_augment:
        x_feats = w1.shape[0] - 1
        flat.append(jnp.asarray(w1[:x_feats, :], compute_dtype))       # W1x
        flat.append(jnp.asarray(w1[x_feats:, :], elementwise_dtype))   # w1t (1,U)
    else:
        x_feats = w1.shape[0]
        flat.append(jnp.asarray(w1, compute_dtype))
    flat.append(jnp.asarray(b1, elementwise_dtype).reshape(1, -1))
    for (w, b) in hidden[1:]:
        flat.append(jnp.asarray(w, compute_dtype))
        flat.append(jnp.asarray(b, elementwise_dtype).reshape(1, -1))
    flat.append(jnp.asarray(w_out, compute_dtype))

    cfg = dict(time_augment=time_augment, n_hidden=n_hidden,
               nb_units=nb_units, x_feats=x_feats, out_feats=out_feats,
               compute_dtype=compute_dtype,
               elementwise_dtype=elementwise_dtype)
    return tuple(flat), cfg


# ---------------------------------------------------------------------------
# Shared in-kernel MLP (used by the single-eval kernel and the fused
# integrator kernel).
# ---------------------------------------------------------------------------
def _mlp_apply(x, t, p_refs, cfg):
    """ODEFunc MLP on a VMEM-resident batch tile.

    x: [bb, 2*dim] (compute_dtype); t: [bb, 1] array, scalar, or None.
    Returns f32 [bb, out_feats].
    """
    ew = cfg["elementwise_dtype"]
    cd = cfg["compute_dtype"]

    if cfg["time_augment"]:
        w1x, w1t, b1 = p_refs[0], p_refs[1], p_refs[2]
        idx = 3
        # concat([x, t]) @ W1  ==  x @ W1[:2d]  +  t * W1[2d]   (no concat)
        acc = jnp.dot(x, w1x[...], preferred_element_type=jnp.float32)
        acc = (acc + t * w1t[...]).astype(ew)
    else:
        w1, b1 = p_refs[0], p_refs[1]
        idx = 2
        acc = jnp.dot(x, w1[...], preferred_element_type=jnp.float32).astype(ew)
    h = jnp.tanh(acc + b1[...].astype(ew)).astype(cd)

    for li in range(cfg["n_hidden"] - 1):
        w_ref = p_refs[idx + 2 * li]
        b_ref = p_refs[idx + 2 * li + 1]
        acc = jnp.dot(h, w_ref[...], preferred_element_type=jnp.float32).astype(ew)
        h = jnp.tanh(acc + b_ref[...].astype(ew)).astype(cd)

    w_out = p_refs[-1]
    return jnp.dot(h, w_out[...], preferred_element_type=jnp.float32)


# ---------------------------------------------------------------------------
# Single ODEFunc evaluation.
# ---------------------------------------------------------------------------
def _forward_kernel_factory(cfg):
    aug = cfg["time_augment"]

    def kernel(*refs):
        o_ref = refs[-1]
        if aug:
            x_ref, t_ref = refs[0], refs[1]
            p_refs = refs[2:-1]
            t = t_ref[...].astype(jnp.float32)
        else:
            x_ref = refs[0]
            p_refs = refs[1:-1]
            t = None
        o_ref[...] = _mlp_apply(x_ref[...], t, p_refs, cfg).astype(o_ref.dtype)

    return kernel


def odefunc_forward(x, t, prepared, *, batch_block=1024):
    """One ODEFunc evaluation: MLP(concat([x, t])) (or MLP(x)).

    x: [B, 2*dim]; t: [B, 1] (ignored if time_augment=False).
    prepared: output of prepare_params().
    """
    flat_params, cfg = prepared
    B, x_feats = x.shape
    assert x_feats == cfg["x_feats"]
    out_feats = cfg["out_feats"]
    cd = cfg["compute_dtype"]
    aug = cfg["time_augment"]

    align = 16 if cd == jnp.bfloat16 else 8
    bb, grid_n = _choose_batch_tiles(B, batch_block, align)
    b_pad = bb * grid_n

    x_in = x.astype(cd)
    if b_pad != B:                      # pad only when the batch is ragged
        x_in = jnp.pad(x_in, ((0, b_pad - B), (0, 0)))
    inputs = [x_in]
    in_specs = [pl.BlockSpec((bb, x_feats), lambda i: (i, 0))]
    if aug:
        t_in = t.astype(jnp.float32)
        if b_pad != B:
            t_in = jnp.pad(t_in, ((0, b_pad - B), (0, 0)))
        inputs.append(t_in)
        in_specs.append(pl.BlockSpec((bb, 1), lambda i: (i, 0)))

    # Weights: whole array per block, constant block index -> VMEM-resident
    # across the batch grid.  (These ARE pallas_call operands — the fix.)
    for p in flat_params:
        inputs.append(p)
        in_specs.append(pl.BlockSpec(p.shape, lambda i: (0, 0)))

    out_spec = pl.BlockSpec((bb, out_feats), lambda i: (i, 0))

    nb_units = cfg["nb_units"]
    in_dim = x_feats + (1 if aug else 0)
    flops = 2 * b_pad * (in_dim * nb_units
                         + (cfg["n_hidden"] - 1) * nb_units * nb_units
                         + nb_units * out_feats)
    transc = b_pad * nb_units * cfg["n_hidden"]
    param_bytes = sum(int(p.size) * p.dtype.itemsize for p in flat_params)
    bytes_accessed = (param_bytes
                      + b_pad * x_feats * x_in.dtype.itemsize
                      + (b_pad * 4 if aug else 0)
                      + b_pad * out_feats * 4)

    out = pl.pallas_call(
        _forward_kernel_factory(cfg),
        out_shape=jax.ShapeDtypeStruct((b_pad, out_feats), jnp.float32),
        grid_spec=pltpu.PrefetchScalarGridSpec(
            num_scalar_prefetch=0,
            grid=(grid_n,),
            in_specs=in_specs,
            out_specs=out_spec,
        ),
        compiler_params=pltpu.CompilerParams(
            dimension_semantics=("parallel",)),
        cost_estimate=pl.CostEstimate(flops=flops, transcendentals=transc,
                                      bytes_accessed=bytes_accessed),
    )(*inputs)

    return out[:B] if b_pad != B else out


def odefunc_forward_multi(xs, ts, prepared, **kw):
    """S independent f(x, t) evaluations fused into ONE pallas_call.

    Stages are stacked along the batch (M) dimension, so the weights are
    DMA'd into VMEM once and every dot sees the largest possible M.
    """
    S, B = xs.shape[0], xs.shape[1]
    x_flat = xs.reshape(S * B, xs.shape[2])
    t_flat = ts.reshape(S * B, ts.shape[2]) if prepared[1]["time_augment"] else None
    out = odefunc_forward(x_flat, t_flat, prepared, **kw)
    return out.reshape(S, B, out.shape[-1])


# ---------------------------------------------------------------------------
# Fused in-kernel integrator (the sequential-stage fusion from the old TODO).
# ---------------------------------------------------------------------------
def _integrate_kernel_factory(cfg, n_steps, t0, dt):
    aug = cfg["time_augment"]
    cd = cfg["compute_dtype"]

    def kernel(*refs):
        o_ref = refs[-1]
        x_ref = refs[0]
        p_refs = refs[1:-1]

        def body(k, xk):
            tk = (t0 + k.astype(jnp.float32) * dt) if aug else None
            fk = _mlp_apply(xk.astype(cd), tk, p_refs, cfg)
            return xk + dt * fk

        x_final = lax.fori_loop(0, n_steps, body,
                                x_ref[...].astype(jnp.float32))
        o_ref[...] = x_final.astype(o_ref.dtype)

    return kernel


def odefunc_integrate(x0, prepared, *, t0=0.0, dt=0.05, n_steps=16,
                      batch_block=1024):
    """Fused explicit-Euler trajectory: x_{k+1} = x_k + dt * f(x_k, t_k).

    The whole sequential integration runs inside ONE pallas_call: weights are
    loaded into VMEM once and the state never round-trips through HBM between
    steps (no per-eval dispatch / DMA overhead).
    # TODO(synk): higher-order symplectic/RK stages of the TRS-ODEN solver
    # would slot into `body` the same way; only explicit Euler is shown here.
    """
    flat_params, cfg = prepared
    B, x_feats = x0.shape
    assert x_feats == cfg["x_feats"] == cfg["out_feats"]

    align = 16 if cfg["compute_dtype"] == jnp.bfloat16 else 8
    bb, grid_n = _choose_batch_tiles(B, batch_block, align)
    b_pad = bb * grid_n

    x_in = x0.astype(jnp.float32)
    if b_pad != B:
        # Padded rows are zeros; the MLP is row-wise so they never mix with
        # real state and are sliced off below.
        x_in = jnp.pad(x_in, ((0, b_pad - B), (0, 0)))

    inputs = [x_in]
    in_specs = [pl.BlockSpec((bb, x_feats), lambda i: (i, 0))]
    for p in flat_params:
        inputs.append(p)
        in_specs.append(pl.BlockSpec(p.shape, lambda i: (0, 0)))

    nb_units = cfg["nb_units"]
    in_dim = x_feats + (1 if cfg["time_augment"] else 0)
    flops = 2 * n_steps * b_pad * (in_dim * nb_units
                                   + (cfg["n_hidden"] - 1) * nb_units * nb_units
                                   + nb_units * x_feats)
    transc = n_steps * b_pad * nb_units * cfg["n_hidden"]
    param_bytes = sum(int(p.size) * p.dtype.itemsize for p in flat_params)
    bytes_accessed = param_bytes + 2 * b_pad * x_feats * 4

    out = pl.pallas_call(
        _integrate_kernel_factory(cfg, int(n_steps), float(t0), float(dt)),
        out_shape=jax.ShapeDtypeStruct((b_pad, x_feats), jnp.float32),
        grid_spec=pltpu.PrefetchScalarGridSpec(
            num_scalar_prefetch=0,
            grid=(grid_n,),
            in_specs=in_specs,
            out_specs=pl.BlockSpec((bb, x_feats), lambda i: (i, 0)),
        ),
        compiler_params=pltpu.CompilerParams(
            dimension_semantics=("parallel",)),
        cost_estimate=pl.CostEstimate(flops=flops, transcendentals=transc,
                                      bytes_accessed=bytes_accessed),
    )(*inputs)

    return out[:B] if b_pad != B else out


# ---------------------------------------------------------------------------
# Parameter init (PyTorch nn.Linear-style) and pure-JAX references.
# ---------------------------------------------------------------------------
def init_odefunc_params(key, dim=4, time_augment=True, nb_units=128,
                        nb_layers=2):
    """U(-1/sqrt(fan_in), 1/sqrt(fan_in)) init; weights stored as [in, out]."""
    in_dim = 2 * dim + 1 if time_augment else 2 * dim
    out_dim = 2 * dim
    params = []
    fan_in = in_dim
    for _ in range(nb_layers):
        key, kw, kb = jax.random.split(key, 3)
        bound = 1.0 / jnp.sqrt(fan_in)
        w = jax.random.uniform(kw, (fan_in, nb_units), jnp.float32, -bound, bound)
        b = jax.random.uniform(kb, (nb_units,), jnp.float32, -bound, bound)
        params.append((w, b))
        fan_in = nb_units
    key, kw = jax.random.split(key)
    bound = 1.0 / jnp.sqrt(fan_in)
    w_out = jax.random.uniform(kw, (fan_in, out_dim), jnp.float32, -bound, bound)
    params.append(w_out)
    return params


def odefunc_reference(x, t, params, *, time_augment=True):
    inputs = jnp.concatenate([x, t], axis=1) if time_augment else x
    h = inputs
    for (w, b) in params[:-1]:
        h = jnp.tanh(h @ w + b)
    return h @ params[-1]


def integrate_reference(x0, params, *, t0, dt, n_steps, time_augment=True):
    x = x0
    for k in range(n_steps):
        tk = jnp.full((x.shape[0], 1), t0 + k * dt, jnp.float32)
        x = x + dt * odefunc_reference(x, tk, params, time_augment=time_augment)
    return x


if __name__ == "__main__":
    # dim=4, time_augment=True -> input feats = 9; nb_units=128, nb_layers=2:
    #   Linear(9,128)+tanh, Linear(128,128)+tanh, Linear(128,8, bias=False)
    dim = 4
    nb_units = 128
    nb_layers = 2
    batch = 16

    key = jax.random.PRNGKey(0)
    key, kx, kt = jax.random.split(key, 3)
    x = jax.random.normal(kx, (batch, 2 * dim), jnp.float32)
    t = jax.random.normal(kt, (batch, 1), jnp.float32)

    params = init_odefunc_params(key, dim=dim, time_augment=True,
                                 nb_units=nb_units, nb_layers=nb_layers)
    prepared = prepare_params(params, time_augment=True)

    # --- single forward evaluation (time-augmented) -------------------------
    out = jax.block_until_ready(odefunc_forward(x, t, prepared))
    ref = odefunc_reference(x, t, params, time_augment=True)
    assert out.shape == (batch, 2 * dim)
    assert jnp.allclose(out, ref, atol=1e-5, rtol=1e-5)

    # --- fused multi-evaluation (weights loaded into VMEM once) -------------
    S = 3
    key, kxs, kts = jax.random.split(key, 3)
    xs = jax.random.normal(kxs, (S, batch, 2 * dim), jnp.float32)
    ts = jax.random.normal(kts, (S, batch, 1), jnp.float32)
    outs = jax.block_until_ready(odefunc_forward_multi(xs, ts, prepared))
    refs = jnp.stack([odefunc_reference(xs[s], ts[s], params, time_augment=True)
                      for s in range(S)])
    assert jnp.allclose(outs, refs, atol=1e-5, rtol=1e-5)

    # --- fused in-kernel Euler integration (sequential stages, one call) ----
    n_steps, dt_, t0_ = 8, 0.05, 0.0
    traj = jax.block_until_ready(
        odefunc_integrate(x, prepared, t0=t0_, dt=dt_, n_steps=n_steps))
    traj_ref = integrate_reference(x, params, t0=t0_, dt=dt_, n_steps=n_steps,
                                   time_augment=True)
    assert jnp.allclose(traj, traj_ref, atol=1e-4, rtol=1e-4)

    # --- non-time-augmented, single hidden layer, ragged batch --------------
    params2 = init_odefunc_params(jax.random.PRNGKey(1), dim=dim,
                                  time_augment=False, nb_units=nb_units,
                                  nb_layers=1)
    prepared2 = prepare_params(params2, time_augment=False)
    x2 = jax.random.normal(jax.random.PRNGKey(2), (11, 2 * dim), jnp.float32)
    out2 = jax.block_until_ready(odefunc_forward(x2, None, prepared2))
    ref2 = odefunc_reference(x2, None, params2, time_augment=False)
    assert jnp.allclose(out2, ref2, atol=1e-5, rtol=1e-5)

    # --- bf16 MXU-operand + bf16 elementwise path (v6e/v7x), loose tol ------
    prepared_bf16 = prepare_params(params, time_augment=True,
                                   compute_dtype=jnp.bfloat16,
                                   elementwise_dtype=jnp.bfloat16)
    out_bf16 = jax.block_until_ready(odefunc_forward(x, t, prepared_bf16))
    assert jnp.allclose(out_bf16, ref, atol=5e-2, rtol=5e-2)

    print("KERNEL_OK")
</pallas_src>

<mosaic_0001>
module attributes {stable_mosaic.version = 11 : i64} {
  func.func @kernel(%arg0: i32, %arg1: memref<16x8xf32, #tpu.memory_space<vmem>>, %arg2: memref<16x1xf32, #tpu.memory_space<vmem>>, %arg3: memref<8x128xf32, #tpu.memory_space<vmem>>, %arg4: memref<1x128xf32, #tpu.memory_space<vmem>>, %arg5: memref<1x128xf32, #tpu.memory_space<vmem>>, %arg6: memref<128x128xf32, #tpu.memory_space<vmem>>, %arg7: memref<1x128xf32, #tpu.memory_space<vmem>>, %arg8: memref<128x8xf32, #tpu.memory_space<vmem>>, %arg9: memref<16x8xf32, #tpu.memory_space<vmem>>) attributes {dimension_semantics = [#tpu.dimension_semantics<parallel>], iteration_bounds = array<i64: 1>, scalar_prefetch = 0 : i64, scratch_operands = 0 : i64, tpu.core_type = #tpu.core_type<tc>, window_params = [{transform_indices = @transform_0, window_bounds = array<i64: 16, 8>}, {transform_indices = @transform_1, window_bounds = array<i64: 16, 1>}, {pipeline_mode = #tpu.pipeline_mode<synchronous>, transform_indices = @transform_2, window_bounds = array<i64: 8, 128>}, {pipeline_mode = #tpu.pipeline_mode<synchronous>, transform_indices = @transform_3, window_bounds = array<i64: 1, 128>}, {pipeline_mode = #tpu.pipeline_mode<synchronous>, transform_indices = @transform_4, window_bounds = array<i64: 1, 128>}, {pipeline_mode = #tpu.pipeline_mode<synchronous>, transform_indices = @transform_5, window_bounds = array<i64: 128, 128>}, {pipeline_mode = #tpu.pipeline_mode<synchronous>, transform_indices = @transform_6, window_bounds = array<i64: 1, 128>}, {pipeline_mode = #tpu.pipeline_mode<synchronous>, transform_indices = @transform_7, window_bounds = array<i64: 128, 8>}, {transform_indices = @transform_8, window_bounds = array<i64: 16, 8>}]} {
    %c0 = arith.constant 0 : index
    %c0_0 = arith.constant 0 : index
    %0 = vector.load %arg2[%c0, %c0_0] : memref<16x1xf32, #tpu.memory_space<vmem>>, vector<16x1xf32>
    %c0_1 = arith.constant 0 : index
    %c0_2 = arith.constant 0 : index
    %1 = vector.load %arg1[%c0_1, %c0_2] : memref<16x8xf32, #tpu.memory_space<vmem>>, vector<16x8xf32>
    %c0_3 = arith.constant 0 : index
    %c0_4 = arith.constant 0 : index
    %2 = vector.load %arg3[%c0_3, %c0_4] : memref<8x128xf32, #tpu.memory_space<vmem>>, vector<8x128xf32>
    %cst = arith.constant dense<0.000000e+00> : vector<16x128xf32>
    %3 = tpu.matmul %1, %2, %cst {dimension_numbers = #tpu.dot_dimension_numbers<[1], [0], [0], [1], [0, 0, 1, 1], [], []>, precision = #tpu.contract_precision<fp32>} : vector<16x8xf32>, vector<8x128xf32>, vector<16x128xf32> -> vector<16x128xf32>
    %c0_5 = arith.constant 0 : index
    %c0_6 = arith.constant 0 : index
    %4 = vector.load %arg4[%c0_5, %c0_6] : memref<1x128xf32, #tpu.memory_space<vmem>>, vector<1x128xf32>
    %5 = vector.broadcast %0 : vector<16x1xf32> to vector<16x128xf32>
    %6 = vector.broadcast %4 : vector<1x128xf32> to vector<16x128xf32>
    %7 = arith.mulf %5, %6 : vector<16x128xf32>
    %8 = arith.addf %3, %7 : vector<16x128xf32>
    %c0_7 = arith.constant 0 : index
    %c0_8 = arith.constant 0 : index
    %9 = vector.load %arg5[%c0_7, %c0_8] : memref<1x128xf32, #tpu.memory_space<vmem>>, vector<1x128xf32>
    %10 = vector.broadcast %9 : vector<1x128xf32> to vector<16x128xf32>
    %11 = arith.addf %8, %10 : vector<16x128xf32>
    %12 = math.tanh %11 : vector<16x128xf32>
    %c0_9 = arith.constant 0 : index
    %c0_10 = arith.constant 0 : index
    %13 = vector.load %arg6[%c0_9, %c0_10] : memref<128x128xf32, #tpu.memory_space<vmem>>, vector<128x128xf32>
    %cst_11 = arith.constant dense<0.000000e+00> : vector<16x128xf32>
    %14 = tpu.matmul %12, %13, %cst_11 {dimension_numbers = #tpu.dot_dimension_numbers<[1], [0], [0], [1], [0, 0, 1, 1], [], []>, precision = #tpu.contract_precision<fp32>} : vector<16x128xf32>, vector<128x128xf32>, vector<16x128xf32> -> vector<16x128xf32>
    %c0_12 = arith.constant 0 : index
    %c0_13 = arith.constant 0 : index
    %15 = vector.load %arg7[%c0_12, %c0_13] : memref<1x128xf32, #tpu.memory_space<vmem>>, vector<1x128xf32>
    %16 = vector.broadcast %15 : vector<1x128xf32> to vector<16x128xf32>
    %17 = arith.addf %14, %16 : vector<16x128xf32>
    %18 = math.tanh %17 : vector<16x128xf32>
    %c0_14 = arith.constant 0 : index
    %c0_15 = arith.constant 0 : index
    %19 = vector.load %arg8[%c0_14, %c0_15] : memref<128x8xf32, #tpu.memory_space<vmem>>, vector<128x8xf32>
    %cst_16 = arith.constant dense<0.000000e+00> : vector<16x8xf32>
    %20 = tpu.matmul %18, %19, %cst_16 {dimension_numbers = #tpu.dot_dimension_numbers<[1], [0], [0], [1], [0, 0, 1, 1], [], []>, precision = #tpu.contract_precision<fp32>} : vector<16x128xf32>, vector<128x8xf32>, vector<16x8xf32> -> vector<16x8xf32>
    %c0_17 = arith.constant 0 : index
    %c0_18 = arith.constant 0 : index
    %21 = vector.load %arg9[%c0_17, %c0_18] : memref<16x8xf32, #tpu.memory_space<vmem>>, vector<16x8xf32>
    tpu.vector_store %arg9[%c0_17, %c0_18], %20 {strides = array<i32>} : memref<16x8xf32, #tpu.memory_space<vmem>>, vector<16x8xf32>,
    return
  }
  func.func @transform_0(%arg0: i32) -> (i32, i32) {
    %c0_i32 = arith.constant 0 : i32
    %c0_i32_0 = arith.constant 0 : i32
    return %arg0, %c0_i32 : i32, i32
  }
  func.func @transform_1(%arg0: i32) -> (i32, i32) {
    %c0_i32 = arith.constant 0 : i32
    %c0_i32_0 = arith.constant 0 : i32
    return %arg0, %c0_i32 : i32, i32
  }
  func.func @transform_2(%arg0: i32) -> (i32, i32) {
    %c0_i32 = arith.constant 0 : i32
    %c0_i32_0 = arith.constant 0 : i32
    %c0_i32_1 = arith.constant 0 : i32
    return %c0_i32, %c0_i32_0 : i32, i32
  }
  func.func @transform_3(%arg0: i32) -> (i32, i32) {
    %c0_i32 = arith.constant 0 : i32
    %c0_i32_0 = arith.constant 0 : i32
    %c0_i32_1 = arith.constant 0 : i32
    return %c0_i32, %c0_i32_0 : i32, i32
  }
  func.func @transform_4(%arg0: i32) -> (i32, i32) {
    %c0_i32 = arith.constant 0 : i32
    %c0_i32_0 = arith.constant 0 : i32
    %c0_i32_1 = arith.constant 0 : i32
    return %c0_i32, %c0_i32_0 : i32, i32
  }
  func.func @transform_5(%arg0: i32) -> (i32, i32) {
    %c0_i32 = arith.constant 0 : i32
    %c0_i32_0 = arith.constant 0 : i32
    %c0_i32_1 = arith.constant 0 : i32
    return %c0_i32, %c0_i32_0 : i32, i32
  }
  func.func @transform_6(%arg0: i32) -> (i32, i32) {
    %c0_i32 = arith.constant 0 : i32
    %c0_i32_0 = arith.constant 0 : i32
    %c0_i32_1 = arith.constant 0 : i32
    return %c0_i32, %c0_i32_0 : i32, i32
  }
  func.func @transform_7(%arg0: i32) -> (i32, i32) {
    %c0_i32 = arith.constant 0 : i32
    %c0_i32_0 = arith.constant 0 : i32
    %c0_i32_1 = arith.constant 0 : i32
    return %c0_i32, %c0_i32_0 : i32, i32
  }
  func.func @transform_8(%arg0: i32) -> (i32, i32) {
    %c0_i32 = arith.constant 0 : i32
    %c0_i32_0 = arith.constant 0 : i32
    return %arg0, %c0_i32 : i32, i32
  }
}

</mosaic_0001>

<llo_original>
// kernel: tpu_custom_call.1
$region0: #{tpu_custom_call.1}
  #allocation0 [shape = 'u32[]', space=smem, size = 0x4, offset = 0x4, fixed_abs, tag = 'smem constant byte address 0x4 - core index']
  #allocation1 [shape = 'u32[72,128]{1,0:T(1,128)}', space=vmem, size = 0x9000, scoped, tag = 'internal scratch']
  %s0 = inlined_call_operand.vmem [shape: f32[16,8], index: 0, kind: input, shape index: {}]
  %s1 = inlined_call_operand.vmem [shape: f32[16,1], index: 1, kind: input, shape index: {}]
  %s2 = inlined_call_operand.vmem [shape: f32[8,128], index: 2, kind: input, shape index: {}]
  %s3 = inlined_call_operand.vmem [shape: f32[1,128], index: 3, kind: input, shape index: {}]
  %s4 = inlined_call_operand.vmem [shape: f32[1,128], index: 4, kind: input, shape index: {}]
  %s5 = inlined_call_operand.vmem [shape: f32[128,128], index: 5, kind: input, shape index: {}]
  %s6 = inlined_call_operand.vmem [shape: f32[1,128], index: 6, kind: input, shape index: {}]
  %s7 = inlined_call_operand.vmem [shape: f32[128,8], index: 7, kind: input, shape index: {}]
  %s8 = inlined_call_operand.vmem [shape: f32[16,8], index: 8, kind: output, shape index: {}]
  %s9 = sld [smem:[#allocation0]]
  $region42: #{tpu_custom_call.1} parent=0
    _
  %s11 = ssub.s32 1, %s9
  %s12 = scalar_select 0, %s11, %s9
  // Predicated region
  $region2: #{tpu_custom_call.1} parent=0 // pred_check
    _
  $region3: #{tpu_custom_call.1} parent=0 // pred_check_branch
    %14 = sbr.rel (0) target = $region5
  $region4: #{tpu_custom_call.1} parent=0 // pred_region
    _
  $region5: #{tpu_custom_call.1} parent=0 // pred_fallthru
    _
  // Predicated region
  $region6: #{tpu_custom_call.1} parent=0 // pred_check
    _
  $region7: #{tpu_custom_call.1} parent=0 // pred_check_branch
    %16 = sbr.rel (0) target = $region9
  $region8: #{tpu_custom_call.1} parent=0 // pred_region
    _
  $region9: #{tpu_custom_call.1} parent=0 // pred_fallthru
    _
  // Predicated region
  $region10: #{tpu_custom_call.1} parent=0 // pred_check
    _
  $region11: #{tpu_custom_call.1} parent=0 // pred_check_branch
    %18 = sbr.rel (0) target = $region13
  $region12: #{tpu_custom_call.1} parent=0 // pred_region
    _
  $region13: #{tpu_custom_call.1} parent=0 // pred_fallthru
    _
  // Predicated region
  $region14: #{tpu_custom_call.1} parent=0 // pred_check
    _
  $region15: #{tpu_custom_call.1} parent=0 // pred_check_branch
    %20 = sbr.rel (0) target = $region17
  $region16: #{tpu_custom_call.1} parent=0 // pred_region
    _
  $region17: #{tpu_custom_call.1} parent=0 // pred_fallthru
    _
  // Predicated region
  $region18: #{tpu_custom_call.1} parent=0 // pred_check
    _
  $region19: #{tpu_custom_call.1} parent=0 // pred_check_branch
    %22 = sbr.rel (0) target = $region21
  $region20: #{tpu_custom_call.1} parent=0 // pred_region
    _
  $region21: #{tpu_custom_call.1} parent=0 // pred_fallthru
    _
  // Predicated region
  $region22: #{tpu_custom_call.1} parent=0 // pred_check
    _
  $region23: #{tpu_custom_call.1} parent=0 // pred_check_branch
    %24 = sbr.rel (0) target = $region25
  $region24: #{tpu_custom_call.1} parent=0 // pred_region
    _
  $region25: #{tpu_custom_call.1} parent=0 // pred_fallthru
    _
  // Predicated region
  $region26: #{tpu_custom_call.1} parent=0 // pred_check
    _
  $region27: #{tpu_custom_call.1} parent=0 // pred_check_branch
    %26 = sbr.rel (0) target = $region29
  $region28: #{tpu_custom_call.1} parent=0 // pred_region
    _
  $region29: #{tpu_custom_call.1} parent=0 // pred_fallthru
    _
  // Predicated region
  $region30: #{tpu_custom_call.1} parent=0 // pred_check
    _
  $region31: #{tpu_custom_call.1} parent=0 // pred_check_branch
    %28 = sbr.rel (0) target = $region33
  $region32: #{tpu_custom_call.1} parent=0 // pred_region
    _
  $region33: #{tpu_custom_call.1} parent=0 // pred_fallthru
    _
  %v29 = vld [vmem:[%s1] sm:$0xff]
  %v30 = vld [vmem:[%s1 + $0x8] sm:$0xff]
  %v31 = vld [vmem:[%s0] sm:$0xff]
  %v32 = vld [vmem:[%s0 + $0x8] sm:$0xff]
  %v33 = vld [vmem:[%s2] sm:$0xff]
  %v34 = vld [vmem:[%s3] sm:$0x1]
  %36 = vset.pattern.permute.xlu0 0
  %37 = vperm.xlu0 %36, %v29
  %v38 = vpop.permute.xlu0 %37
  %41 = vset.pattern.permute.xlu0 0
  %42 = vperm.xlu0 %41, %v30
  %v43 = vpop.permute.xlu0 %42
  %v46 = vperm.slane %v34, 0
  %v48 = vmul.f32 %v38, %v46
  %v49 = vmul.f32 %v43, %v46
  %vm50 = vcmask 64512
  %v52 = vsel %vm50, %v31, 0
  %v55 = vsel %vm50, %v32, 0
  %57 = vmatpush.msra.mxu0 0.0
  %58 = vmatpush.msra.mxu0 0.0
  %59 = vmatpush.msra.mxu0 0.0
  %60 = vmatpush.msra.mxu0 0.0
  %61 = vmatpush.msra.mxu0 0.0
  %62 = vmatpush.msra.mxu0 0.0
  %63 = vmatpush.msra.mxu0 0.0
  %64 = vmatpush.msra.mxu0 0.0
  %65 = vmatpush.msra.mxu0 0.0
  %66 = vmatpush.msra.mxu0 0.0
  %67 = vmatpush.msra.mxu0 0.0
  %68 = vmatpush.msra.mxu0 0.0
  %69 = vmatpush.msra.mxu0 0.0
  %70 = vmatpush.msra.mxu0 0.0
  %71 = vmatpush.msra.mxu0 0.0
  %v72 = vand.u32 %v33, 4294901760
  %73 = vmatpush.msra.mxu0 %v72
  %v74 = vand.u32 %v52, 4294901760
  %v75 = vsub.f32 %v52, %v74
  %v76 = vand.u32 %v75, 4294901760
  %v77 = vsub.f32 %v75, %v76
  %v78 = vand.u32 %v77, 4294901760
  %79 = vmatmul.f32.gmra.mxu0 %v78
  %v80 = vpop.f32.mrf.mxu0
  %v81 = vadd.f32 %v48, %v80
  %v82 = vand.u32 %v55, 4294901760
  %v83 = vsub.f32 %v55, %v82
  %v84 = vand.u32 %v83, 4294901760
  %v85 = vsub.f32 %v83, %v84
  %v86 = vand.u32 %v85, 4294901760
  %87 = vmatmul.f32.gmra.mxu0 %v86
  %v88 = vpop.f32.mrf.mxu0
  %v89 = vadd.f32 %v49, %v88
  %90 = vdwg.mxu0
  %91 = vmatpush.msra.mxu0 0.0
  %92 = vmatpush.msra.mxu0 0.0
  %93 = vmatpush.msra.mxu0 0.0
  %94 = vmatpush.msra.mxu0 0.0
  %95 = vmatpush.msra.mxu0 0.0
  %96 = vmatpush.msra.mxu0 0.0
  %97 = vmatpush.msra.mxu0 0.0
  %98 = vmatpush.msra.mxu0 0.0
  %99 = vmatpush.msra.mxu0 0.0
  %100 = vmatpush.msra.mxu0 0.0
  %101 = vmatpush.msra.mxu0 0.0
  %102 = vmatpush.msra.mxu0 0.0
  %103 = vmatpush.msra.mxu0 0.0
  %104 = vmatpush.msra.mxu0 0.0
  %105 = vmatpush.msra.mxu0 0.0
  %v106 = vand.u32 %v33, 4294901760
  %v107 = vsub.f32 %v33, %v106
  %v108 = vand.u32 %v107, 4294901760
  %v109 = vsub.f32 %v107, %v108
  %v110 = vand.u32 %v109, 4294901760
  %111 = vmatpush.msra.mxu0 %v110
  %v112 = vand.u32 %v52, 4294901760
  %113 = vmatmul.f32.gmra.mxu0 %v112
  %v114 = vpop.f32.mrf.mxu0
  %v115 = vadd.f32 %v81, %v114
  %v116 = vand.u32 %v55, 4294901760
  %117 = vmatmul.f32.gmra.mxu0 %v116
  %v118 = vpop.f32.mrf.mxu0
  %v119 = vadd.f32 %v89, %v118
  %120 = vdwg.mxu0
  %121 = vmatpush.msra.mxu0 0.0
  %122 = vmatpush.msra.mxu0 0.0
  %123 = vmatpush.msra.mxu0 0.0
  %124 = vmatpush.msra.mxu0 0.0
  %125 = vmatpush.msra.mxu0 0.0
  %126 = vmatpush.msra.mxu0 0.0
  %127 = vmatpush.msra.mxu0 0.0
  %128 = vmatpush.msra.mxu0 0.0
  %129 = vmatpush.msra.mxu0 0.0
  %130 = vmatpush.msra.mxu0 0.0
  %131 = vmatpush.msra.mxu0 0.0
  %132 = vmatpush.msra.mxu0 0.0
  %133 = vmatpush.msra.mxu0 0.0
  %134 = vmatpush.msra.mxu0 0.0
  %135 = vmatpush.msra.mxu0 0.0
  %v136 = vand.u32 %v33, 4294901760
  %v137 = vsub.f32 %v33, %v136
  %138 = vmatpush.msra.mxu0 %v137
  %v139 = vand.u32 %v52, 4294901760
  %v140 = vsub.f32 %v52, %v139
  %141 = vmatmul.f32.gmra.mxu0 %v140
  %v142 = vpop.f32.mrf.mxu0
  %v143 = vadd.f32 %v115, %v142
  %v144 = vand.u32 %v55, 4294901760
  %v145 = vsub.f32 %v55, %v144
  %146 = vmatmul.f32.gmra.mxu0 %v145
  %v147 = vpop.f32.mrf.mxu0
  %v148 = vadd.f32 %v119, %v147
  %149 = vdwg.mxu0
  %150 = vmatpush.msra.mxu0 0.0
  %151 = vmatpush.msra.mxu0 0.0
  %152 = vmatpush.msra.mxu0 0.0
  %153 = vmatpush.msra.mxu0 0.0
  %154 = vmatpush.msra.mxu0 0.0
  %155 = vmatpush.msra.mxu0 0.0
  %156 = vmatpush.msra.mxu0 0.0
  %157 = vmatpush.msra.mxu0 0.0
  %158 = vmatpush.msra.mxu0 0.0
  %159 = vmatpush.msra.mxu0 0.0
  %160 = vmatpush.msra.mxu0 0.0
  %161 = vmatpush.msra.mxu0 0.0
  %162 = vmatpush.msra.mxu0 0.0
  %163 = vmatpush.msra.mxu0 0.0
  %164 = vmatpush.msra.mxu0 0.0
  %v165 = vand.u32 %v33, 4294901760
  %166 = vmatpush.msra.mxu0 %v165
  %v167 = vand.u32 %v52, 4294901760
  %v168 = vsub.f32 %v52, %v167
  %v169 = vand.u32 %v168, 4294901760
  %170 = vmatmul.f32.gmra.mxu0 %v169
  %v171 = vpop.f32.mrf.mxu0
  %v172 = vadd.f32 %v143, %v171
  %v173 = vand.u32 %v55, 4294901760
  %v174 = vsub.f32 %v55, %v173
  %v175 = vand.u32 %v174, 4294901760
  %176 = vmatmul.f32.gmra.mxu0 %v175
  %v177 = vpop.f32.mrf.mxu0
  %v178 = vadd.f32 %v148, %v177
  %179 = vdwg.mxu0
  %180 = vmatpush.msra.mxu0 0.0
  %181 = vmatpush.msra.mxu0 0.0
  %182 = vmatpush.msra.mxu0 0.0
  %183 = vmatpush.msra.mxu0 0.0
  %184 = vmatpush.msra.mxu0 0.0
  %185 = vmatpush.msra.mxu0 0.0
  %186 = vmatpush.msra.mxu0 0.0
  %187 = vmatpush.msra.mxu0 0.0
  %188 = vmatpush.msra.mxu0 0.0
  %189 = vmatpush.msra.mxu0 0.0
  %190 = vmatpush.msra.mxu0 0.0
  %191 = vmatpush.msra.mxu0 0.0
  %192 = vmatpush.msra.mxu0 0.0
  %193 = vmatpush.msra.mxu0 0.0
  %194 = vmatpush.msra.mxu0 0.0
  %v195 = vand.u32 %v33, 4294901760
  %v196 = vsub.f32 %v33, %v195
  %v197 = vand.u32 %v196, 4294901760
  %198 = vmatpush.msra.mxu0 %v197
  %v199 = vand.u32 %v52, 4294901760
  %200 = vmatmul.f32.gmra.mxu0 %v199
  %v201 = vpop.f32.mrf.mxu0
  %v202 = vadd.f32 %v172, %v201
  %v203 = vand.u32 %v55, 4294901760
  %204 = vmatmul.f32.gmra.mxu0 %v203
  %v205 = vpop.f32.mrf.mxu0
  %v206 = vadd.f32 %v178, %v205
  %207 = vdwg.mxu0
  %208 = vmatpush.msra.mxu0 0.0
  %209 = vmatpush.msra.mxu0 0.0
  %210 = vmatpush.msra.mxu0 0.0
  %211 = vmatpush.msra.mxu0 0.0
  %212 = vmatpush.msra.mxu0 0.0
  %213 = vmatpush.msra.mxu0 0.0
  %214 = vmatpush.msra.mxu0 0.0
  %215 = vmatpush.msra.mxu0 0.0
  %216 = vmatpush.msra.mxu0 0.0
  %217 = vmatpush.msra.mxu0 0.0
  %218 = vmatpush.msra.mxu0 0.0
  %219 = vmatpush.msra.mxu0 0.0
  %220 = vmatpush.msra.mxu0 0.0
  %221 = vmatpush.msra.mxu0 0.0
  %222 = vmatpush.msra.mxu0 0.0
  %v223 = vand.u32 %v33, 4294901760
  %224 = vmatpush.msra.mxu0 %v223
  %v225 = vand.u32 %v52, 4294901760
  %226 = vmatmul.f32.gmra.mxu0 %v225
  %v227 = vpop.f32.mrf.mxu0
  %v228 = vadd.f32 %v202, %v227
  %v229 = vand.u32 %v55, 4294901760
  %230 = vmatmul.f32.gmra.mxu0 %v229
  %v231 = vpop.f32.mrf.mxu0
  %v232 = vadd.f32 %v206, %v231
  %233 = vdwg.mxu0
  %v234 = vld [vmem:[%s4] sm:$0x1]
  %v236 = vperm.slane %v234, 0
  %v238 = vadd.f32 %v228, %v236
  %v239 = vadd.f32 %v232, %v236
  %v240 = vtanh.pop %v238
  %v241 = vtanh.pop %v239
  %v242 = vld [vmem:[%s5] sm:$0xff]
  %v243 = vld [vmem:[%s5 + $0x8] sm:$0xff]
  %v244 = vld [vmem:[%s5 + $0x10] sm:$0xff]
  %v245 = vld [vmem:[%s5 + $0x18] sm:$0xff]
  %v246 = vld [vmem:[%s5 + $0x20] sm:$0xff]
  %v247 = vld [vmem:[%s5 + $0x28] sm:$0xff]
  %v248 = vld [vmem:[%s5 + $0x30] sm:$0xff]
  %v249 = vld [vmem:[%s5 + $0x38] sm:$0xff]
  %v250 = vld [vmem:[%s5 + $0x40] sm:$0xff]
  %v251 = vld [vmem:[%s5 + $0x48] sm:$0xff]
  %v252 = vld [vmem:[%s5 + $0x50] sm:$0xff]
  %v253 = vld [vmem:[%s5 + $0x58] sm:$0xff]
  %v254 = vld [vmem:[%s5 + $0x60] sm:$0xff]
  %v255 = vld [vmem:[%s5 + $0x68] sm:$0xff]
  %v256 = vld [vmem:[%s5 + $0x70] sm:$0xff]
  %v257 = vld [vmem:[%s5 + $0x78] sm:$0xff]
  %v258 = vld [vmem:[%s6] sm:$0x1]
  %v260 = vperm.slane %v258, 0
  %v262 = vand.u32 %v257, 4294901760
  %263 = vmatpush.msra.mxu0 %v262
  %v264 = vand.u32 %v256, 4294901760
  %265 = vmatpush.msra.mxu0 %v264
  %v266 = vand.u32 %v255, 4294901760
  %267 = vmatpush.msra.mxu0 %v266
  %v268 = vand.u32 %v254, 4294901760
  %269 = vmatpush.msra.mxu0 %v268
  %v270 = vand.u32 %v253, 4294901760
  %271 = vmatpush.msra.mxu0 %v270
  %v272 = vand.u32 %v252, 4294901760
  %273 = vmatpush.msra.mxu0 %v272
  %v274 = vand.u32 %v251, 4294901760
  %275 = vmatpush.msra.mxu0 %v274
  %v276 = vand.u32 %v250, 4294901760
  %277 = vmatpush.msra.mxu0 %v276
  %v278 = vand.u32 %v249, 4294901760
  %279 = vmatpush.msra.mxu0 %v278
  %v280 = vand.u32 %v248, 4294901760
  %281 = vmatpush.msra.mxu0 %v280
  %v282 = vand.u32 %v247, 4294901760
  %283 = vmatpush.msra.mxu0 %v282
  %v284 = vand.u32 %v246, 4294901760
  %285 = vmatpush.msra.mxu0 %v284
  %v286 = vand.u32 %v245, 4294901760
  %287 = vmatpush.msra.mxu0 %v286
  %v288 = vand.u32 %v244, 4294901760
  %289 = vmatpush.msra.mxu0 %v288
  %v290 = vand.u32 %v243, 4294901760
  %291 = vmatpush.msra.mxu0 %v290
  %v292 = vand.u32 %v242, 4294901760
  %293 = vmatpush.msra.mxu0 %v292
  %v294 = vand.u32 %v240, 4294901760
  %v295 = vsub.f32 %v240, %v294
  %v296 = vand.u32 %v295, 4294901760
  %v297 = vsub.f32 %v295, %v296
  %v298 = vand.u32 %v297, 4294901760
  %299 = vmatmul.f32.gmra.mxu0 %v298
  %v300 = vpop.f32.mrf.mxu0
  %v301 = vadd.f32 %v260, %v300
  %v302 = vand.u32 %v241, 4294901760
  %v303 = vsub.f32 %v241, %v302
  %v304 = vand.u32 %v303, 4294901760
  %v305 = vsub.f32 %v303, %v304
  %v306 = vand.u32 %v305, 4294901760
  %307 = vmatmul.f32.gmra.mxu0 %v306
  %v308 = vpop.f32.mrf.mxu0
  %v309 = vadd.f32 %v260, %v308
  %310 = vdwg.mxu0
  %v311 = vand.u32 %v257, 4294901760
  %v312 = vsub.f32 %v257, %v311
  %v313 = vand.u32 %v312, 4294901760
  %v314 = vsub.f32 %v312, %v313
  %v315 = vand.u32 %v314, 4294901760
  %316 = vmatpush.msra.mxu0 %v315
  %v317 = vand.u32 %v256, 4294901760
  %v318 = vsub.f32 %v256, %v317
  %v319 = vand.u32 %v318, 4294901760
  %v320 = vsub.f32 %v318, %v319
  %v321 = vand.u32 %v320, 4294901760
  %322 = vmatpush.msra.mxu0 %v321
  %v323 = vand.u32 %v255, 4294901760
  %v324 = vsub.f32 %v255, %v323
  %v325 = vand.u32 %v324, 4294901760
  %v326 = vsub.f32 %v324, %v325
  %v327 = vand.u32 %v326, 4294901760
  %328 = vmatpush.msra.mxu0 %v327
  %v329 = vand.u32 %v254, 4294901760
  %v330 = vsub.f32 %v254, %v329
  %v331 = vand.u32 %v330, 4294901760
  %v332 = vsub.f32 %v330, %v331
  %v333 = vand.u32 %v332, 4294901760
  %334 = vmatpush.msra.mxu0 %v333
  %v335 = vand.u32 %v253, 4294901760
  %v336 = vsub.f32 %v253, %v335
  %v337 = vand.u32 %v336, 4294901760
  %v338 = vsub.f32 %v336, %v337
  %v339 = vand.u32 %v338, 4294901760
  %340 = vmatpush.msra.mxu0 %v339
  %v341 = vand.u32 %v252, 4294901760
  %v342 = vsub.f32 %v252, %v341
  %v343 = vand.u32 %v342, 4294901760
  %v344 = vsub.f32 %v342, %v343
  %v345 = vand.u32 %v344, 4294901760
  %346 = vmatpush.msra.mxu0 %v345
  %v347 = vand.u32 %v251, 4294901760
  %v348 = vsub.f32 %v251, %v347
  %v349 = vand.u32 %v348, 4294901760
  %v350 = vsub.f32 %v348, %v349
  %v351 = vand.u32 %v350, 4294901760
  %352 = vmatpush.msra.mxu0 %v351
  %v353 = vand.u32 %v250, 4294901760
  %v354 = vsub.f32 %v250, %v353
  %v355 = vand.u32 %v354, 4294901760
  %v356 = vsub.f32 %v354, %v355
  %v357 = vand.u32 %v356, 4294901760
  %358 = vmatpush.msra.mxu0 %v357
  %v359 = vand.u32 %v249, 4294901760
  %v360 = vsub.f32 %v249, %v359
  %v361 = vand.u32 %v360, 4294901760
  %v362 = vsub.f32 %v360, %v361
  %v363 = vand.u32 %v362, 4294901760
  %364 = vmatpush.msra.mxu0 %v363
  %v365 = vand.u32 %v248, 4294901760
  %v366 = vsub.f32 %v248, %v365
  %v367 = vand.u32 %v366, 4294901760
  %v368 = vsub.f32 %v366, %v367
  %v369 = vand.u32 %v368, 4294901760
  %370 = vmatpush.msra.mxu0 %v369
  %v371 = vand.u32 %v247, 4294901760
  %v372 = vsub.f32 %v247, %v371
  %v373 = vand.u32 %v372, 4294901760
  %v374 = vsub.f32 %v372, %v373
  %v375 = vand.u32 %v374, 4294901760
  %376 = vmatpush.msra.mxu0 %v375
  %v377 = vand.u32 %v246, 4294901760
  %v378 = vsub.f32 %v246, %v377
  %v379 = vand.u32 %v378, 4294901760
  %v380 = vsub.f32 %v378, %v379
  %v381 = vand.u32 %v380, 4294901760
  %382 = vmatpush.msra.mxu0 %v381
  %v383 = vand.u32 %v245, 4294901760
  %v384 = vsub.f32 %v245, %v383
  %v385 = vand.u32 %v384, 4294901760
  %v386 = vsub.f32 %v384, %v385
  %v387 = vand.u32 %v386, 4294901760
  %388 = vmatpush.msra.mxu0 %v387
  %v389 = vand.u32 %v244, 4294901760
  %v390 = vsub.f32 %v244, %v389
  %v391 = vand.u32 %v390, 4294901760
  %v392 = vsub.f32 %v390, %v391
  %v393 = vand.u32 %v392, 4294901760
  %394 = vmatpush.msra.mxu0 %v393
  %v395 = vand.u32 %v243, 4294901760
  %v396 = vsub.f32 %v243, %v395
  %v397 = vand.u32 %v396, 4294901760
  %v398 = vsub.f32 %v396, %v397
  %v399 = vand.u32 %v398, 4294901760
  %400 = vmatpush.msra.mxu0 %v399
  %v401 = vand.u32 %v242, 4294901760
  %v402 = vsub.f32 %v242, %v401
  %v403 = vand.u32 %v402, 4294901760
  %v404 = vsub.f32 %v402, %v403
  %v405 = vand.u32 %v404, 4294901760
  %406 = vmatpush.msra.mxu0 %v405
  %v407 = vand.u32 %v240, 4294901760
  %408 = vmatmul.f32.gmra.mxu0 %v407
  %v409 = vpop.f32.mrf.mxu0
  %v410 = vadd.f32 %v301, %v409
  %v411 = vand.u32 %v241, 4294901760
  %412 = vmatmul.f32.gmra.mxu0 %v411
  %v413 = vpop.f32.mrf.mxu0
  %v414 = vadd.f32 %v309, %v413
  %415 = vdwg.mxu0
  %v416 = vand.u32 %v257, 4294901760
  %v417 = vsub.f32 %v257, %v416
  %418 = vmatpush.msra.mxu0 %v417
  %v419 = vand.u32 %v256, 4294901760
  %v420 = vsub.f32 %v256, %v419
  %421 = vmatpush.msra.mxu0 %v420
  %v422 = vand.u32 %v255, 4294901760
  %v423 = vsub.f32 %v255, %v422
  %424 = vmatpush.msra.mxu0 %v423
  %v425 = vand.u32 %v254, 4294901760
  %v426 = vsub.f32 %v254, %v425
  %427 = vmatpush.msra.mxu0 %v426
  %v428 = vand.u32 %v253, 4294901760
  %v429 = vsub.f32 %v253, %v428
  %430 = vmatpush.msra.mxu0 %v429
  %v431 = vand.u32 %v252, 4294901760
  %v432 = vsub.f32 %v252, %v431
  %433 = vmatpush.msra.mxu0 %v432
  %v434 = vand.u32 %v251, 4294901760
  %v435 = vsub.f32 %v251, %v434
  %436 = vmatpush.msra.mxu0 %v435
  %v437 = vand.u32 %v250, 4294901760
  %v438 = vsub.f32 %v250, %v437
  %439 = vmatpush.msra.mxu0 %v438
  %v440 = vand.u32 %v249, 4294901760
  %v441 = vsub.f32 %v249, %v440
  %442 = vmatpush.msra.mxu0 %v441
  %v443 = vand.u32 %v248, 4294901760
  %v444 = vsub.f32 %v248, %v443
  %445 = vmatpush.msra.mxu0 %v444
  %v446 = vand.u32 %v247, 4294901760
  %v447 = vsub.f32 %v247, %v446
  %448 = vmatpush.msra.mxu0 %v447
  %v449 = vand.u32 %v246, 4294901760
  %v450 = vsub.f32 %v246, %v449
  %451 = vmatpush.msra.mxu0 %v450
  %v452 = vand.u32 %v245, 4294901760
  %v453 = vsub.f32 %v245, %v452
  %454 = vmatpush.msra.mxu0 %v453
  %v455 = vand.u32 %v244, 4294901760
  %v456 = vsub.f32 %v244, %v455
  %457 = vmatpush.msra.mxu0 %v456
  %v458 = vand.u32 %v243, 4294901760
  %v459 = vsub.f32 %v243, %v458
  %460 = vmatpush.msra.mxu0 %v459
  %v461 = vand.u32 %v242, 4294901760
  %v462 = vsub.f32 %v242, %v461
  %463 = vmatpush.msra.mxu0 %v462
  %v464 = vand.u32 %v240, 4294901760
  %v465 = vsub.f32 %v240, %v464
  %466 = vmatmul.f32.gmra.mxu0 %v465
  %v467 = vpop.f32.mrf.mxu0
  %v468 = vadd.f32 %v410, %v467
  %v469 = vand.u32 %v241, 4294901760
  %v470 = vsub.f32 %v241, %v469
  %471 = vmatmul.f32.gmra.mxu0 %v470
  %v472 = vpop.f32.mrf.mxu0
  %v473 = vadd.f32 %v414, %v472
  %474 = vdwg.mxu0
  %v475 = vand.u32 %v257, 4294901760
  %476 = vmatpush.msra.mxu0 %v475
  %v477 = vand.u32 %v256, 4294901760
  %478 = vmatpush.msra.mxu0 %v477
  %v479 = vand.u32 %v255, 4294901760
  %480 = vmatpush.msra.mxu0 %v479
  %v481 = vand.u32 %v254, 4294901760
  %482 = vmatpush.msra.mxu0 %v481
  %v483 = vand.u32 %v253, 4294901760
  %484 = vmatpush.msra.mxu0 %v483
  %v485 = vand.u32 %v252, 4294901760
  %486 = vmatpush.msra.mxu0 %v485
  %v487 = vand.u32 %v251, 4294901760
  %488 = vmatpush.msra.mxu0 %v487
  %v489 = vand.u32 %v250, 4294901760
  %490 = vmatpush.msra.mxu0 %v489
  %v491 = vand.u32 %v249, 4294901760
  %492 = vmatpush.msra.mxu0 %v491
  %v493 = vand.u32 %v248, 4294901760
  %494 = vmatpush.msra.mxu0 %v493
  %v495 = vand.u32 %v247, 4294901760
  %496 = vmatpush.msra.mxu0 %v495
  %v497 = vand.u32 %v246, 4294901760
  %498 = vmatpush.msra.mxu0 %v497
  %v499 = vand.u32 %v245, 4294901760
  %500 = vmatpush.msra.mxu0 %v499
  %v501 = vand.u32 %v244, 4294901760
  %502 = vmatpush.msra.mxu0 %v501
  %v503 = vand.u32 %v243, 4294901760
  %504 = vmatpush.msra.mxu0 %v503
  %v505 = vand.u32 %v242, 4294901760
  %506 = vmatpush.msra.mxu0 %v505
  %v507 = vand.u32 %v240, 4294901760
  %v508 = vsub.f32 %v240, %v507
  %v509 = vand.u32 %v508, 4294901760
  %510 = vmatmul.f32.gmra.mxu0 %v509
  %v511 = vpop.f32.mrf.mxu0
  %v512 = vadd.f32 %v468, %v511
  %v513 = vand.u32 %v241, 4294901760
  %v514 = vsub.f32 %v241, %v513
  %v515 = vand.u32 %v514, 4294901760
  %516 = vmatmul.f32.gmra.mxu0 %v515
  %v517 = vpop.f32.mrf.mxu0
  %v518 = vadd.f32 %v473, %v517
  %519 = vdwg.mxu0
  %v520 = vand.u32 %v257, 4294901760
  %v521 = vsub.f32 %v257, %v520
  %v522 = vand.u32 %v521, 4294901760
  %523 = vmatpush.msra.mxu0 %v522
  %v524 = vand.u32 %v256, 4294901760
  %v525 = vsub.f32 %v256, %v524
  %v526 = vand.u32 %v525, 4294901760
  %527 = vmatpush.msra.mxu0 %v526
  %v528 = vand.u32 %v255, 4294901760
  %v529 = vsub.f32 %v255, %v528
  %v530 = vand.u32 %v529, 4294901760
  %531 = vmatpush.msra.mxu0 %v530
  %v532 = vand.u32 %v254, 4294901760
  %v533 = vsub.f32 %v254, %v532
  %v534 = vand.u32 %v533, 4294901760
  %535 = vmatpush.msra.mxu0 %v534
  %v536 = vand.u32 %v253, 4294901760
  %v537 = vsub.f32 %v253, %v536
  %v538 = vand.u32 %v537, 4294901760
  %539 = vmatpush.msra.mxu0 %v538
  %v540 = vand.u32 %v252, 4294901760
  %v541 = vsub.f32 %v252, %v540
  %v542 = vand.u32 %v541, 4294901760
  %543 = vmatpush.msra.mxu0 %v542
  %v544 = vand.u32 %v251, 4294901760
  %v545 = vsub.f32 %v251, %v544
  %v546 = vand.u32 %v545, 4294901760
  %547 = vmatpush.msra.mxu0 %v546
  %v548 = vand.u32 %v250, 4294901760
  %v549 = vsub.f32 %v250, %v548
  %v550 = vand.u32 %v549, 4294901760
  %551 = vmatpush.msra.mxu0 %v550
  %v552 = vand.u32 %v249, 4294901760
  %v553 = vsub.f32 %v249, %v552
  %v554 = vand.u32 %v553, 4294901760
  %555 = vmatpush.msra.mxu0 %v554
  %v556 = vand.u32 %v248, 4294901760
  %v557 = vsub.f32 %v248, %v556
  %v558 = vand.u32 %v557, 4294901760
  %559 = vmatpush.msra.mxu0 %v558
  %v560 = vand.u32 %v247, 4294901760
  %v561 = vsub.f32 %v247, %v560
  %v562 = vand.u32 %v561, 4294901760
  %563 = vmatpush.msra.mxu0 %v562
  %v564 = vand.u32 %v246, 4294901760
  %v565 = vsub.f32 %v246, %v564
  %v566 = vand.u32 %v565, 4294901760
  %567 = vmatpush.msra.mxu0 %v566
  %v568 = vand.u32 %v245, 4294901760
  %v569 = vsub.f32 %v245, %v568
  %v570 = vand.u32 %v569, 4294901760
  %571 = vmatpush.msra.mxu0 %v570
  %v572 = vand.u32 %v244, 4294901760
  %v573 = vsub.f32 %v244, %v572
  %v574 = vand.u32 %v573, 4294901760
  %575 = vmatpush.msra.mxu0 %v574
  %v576 = vand.u32 %v243, 4294901760
  %v577 = vsub.f32 %v243, %v576
  %v578 = vand.u32 %v577, 4294901760
  %579 = vmatpush.msra.mxu0 %v578
  %v580 = vand.u32 %v242, 4294901760
  %v581 = vsub.f32 %v242, %v580
  %v582 = vand.u32 %v581, 4294901760
  %583 = vmatpush.msra.mxu0 %v582
  %v584 = vand.u32 %v240, 4294901760
  %585 = vmatmul.f32.gmra.mxu0 %v584
  %v586 = vpop.f32.mrf.mxu0
  %v587 = vadd.f32 %v512, %v586
  %v588 = vand.u32 %v241, 4294901760
  %589 = vmatmul.f32.gmra.mxu0 %v588
  %v590 = vpop.f32.mrf.mxu0
  %v591 = vadd.f32 %v518, %v590
  %592 = vdwg.mxu0
  %v593 = vand.u32 %v257, 4294901760
  %594 = vmatpush.msra.mxu0 %v593
  %v595 = vand.u32 %v256, 4294901760
  %596 = vmatpush.msra.mxu0 %v595
  %v597 = vand.u32 %v255, 4294901760
  %598 = vmatpush.msra.mxu0 %v597
  %v599 = vand.u32 %v254, 4294901760
  %600 = vmatpush.msra.mxu0 %v599
  %v601 = vand.u32 %v253, 4294901760
  %602 = vmatpush.msra.mxu0 %v601
  %v603 = vand.u32 %v252, 4294901760
  %604 = vmatpush.msra.mxu0 %v603
  %v605 = vand.u32 %v251, 4294901760
  %606 = vmatpush.msra.mxu0 %v605
  %v607 = vand.u32 %v250, 4294901760
  %608 = vmatpush.msra.mxu0 %v607
  %v609 = vand.u32 %v249, 4294901760
  %610 = vmatpush.msra.mxu0 %v609
  %v611 = vand.u32 %v248, 4294901760
  %612 = vmatpush.msra.mxu0 %v611
  %v613 = vand.u32 %v247, 4294901760
  %614 = vmatpush.msra.mxu0 %v613
  %v615 = vand.u32 %v246, 4294901760
  %616 = vmatpush.msra.mxu0 %v615
  %v617 = vand.u32 %v245, 4294901760
  %618 = vmatpush.msra.mxu0 %v617
  %v619 = vand.u32 %v244, 4294901760
  %620 = vmatpush.msra.mxu0 %v619
  %v621 = vand.u32 %v243, 4294901760
  %622 = vmatpush.msra.mxu0 %v621
  %v623 = vand.u32 %v242, 4294901760
  %624 = vmatpush.msra.mxu0 %v623
  %v625 = vand.u32 %v240, 4294901760
  %626 = vmatmul.f32.gmra.mxu0 %v625
  %v627 = vpop.f32.mrf.mxu0
  %v628 = vadd.f32 %v587, %v627
  %v629 = vand.u32 %v241, 4294901760
  %630 = vmatmul.f32.gmra.mxu0 %v629
  %v631 = vpop.f32.mrf.mxu0
  %v632 = vadd.f32 %v591, %v631
  %633 = vdwg.mxu0
  %v634 = vtanh.pop %v628
  %v635 = vtanh.pop %v632
  %v636 = vld [vmem:[%s7] sm:$0xff]
  %v637 = vld [vmem:[%s7 + $0x8] sm:$0xff]
  %v638 = vld [vmem:[%s7 + $0x10] sm:$0xff]
  %v639 = vld [vmem:[%s7 + $0x18] sm:$0xff]
  %v640 = vld [vmem:[%s7 + $0x20] sm:$0xff]
  %v641 = vld [vmem:[%s7 + $0x28] sm:$0xff]
  %v642 = vld [vmem:[%s7 + $0x30] sm:$0xff]
  %v643 = vld [vmem:[%s7 + $0x38] sm:$0xff]
  %v644 = vld [vmem:[%s7 + $0x40] sm:$0xff]
  %v645 = vld [vmem:[%s7 + $0x48] sm:$0xff]
  %v646 = vld [vmem:[%s7 + $0x50] sm:$0xff]
  %v647 = vld [vmem:[%s7 + $0x58] sm:$0xff]
  %v648 = vld [vmem:[%s7 + $0x60] sm:$0xff]
  %v649 = vld [vmem:[%s7 + $0x68] sm:$0xff]
  %v650 = vld [vmem:[%s7 + $0x70] sm:$0xff]
  %v651 = vld [vmem:[%s7 + $0x78] sm:$0xff]
  %v652 = vand.u32 %v651, 4294901760
  %653 = vmatpush.msra.mxu0 %v652
  %v654 = vand.u32 %v650, 4294901760
  %655 = vmatpush.msra.mxu0 %v654
  %v656 = vand.u32 %v649, 4294901760
  %657 = vmatpush.msra.mxu0 %v656
  %v658 = vand.u32 %v648, 4294901760
  %659 = vmatpush.msra.mxu0 %v658
  %v660 = vand.u32 %v647, 4294901760
  %661 = vmatpush.msra.mxu0 %v660
  %v662 = vand.u32 %v646, 4294901760
  %663 = vmatpush.msra.mxu0 %v662
  %v664 = vand.u32 %v645, 4294901760
  %665 = vmatpush.msra.mxu0 %v664
  %v666 = vand.u32 %v644, 4294901760
  %667 = vmatpush.msra.mxu0 %v666
  %v668 = vand.u32 %v643, 4294901760
  %669 = vmatpush.msra.mxu0 %v668
  %v670 = vand.u32 %v642, 4294901760
  %671 = vmatpush.msra.mxu0 %v670
  %v672 = vand.u32 %v641, 4294901760
  %673 = vmatpush.msra.mxu0 %v672
  %v674 = vand.u32 %v640, 4294901760
  %675 = vmatpush.msra.mxu0 %v674
  %v676 = vand.u32 %v639, 4294901760
  %677 = vmatpush.msra.mxu0 %v676
  %v678 = vand.u32 %v638, 4294901760
  %679 = vmatpush.msra.mxu0 %v678
  %v680 = vand.u32 %v637, 4294901760
  %681 = vmatpush.msra.mxu0 %v680
  %v682 = vand.u32 %v636, 4294901760
  %683 = vmatpush.msra.mxu0 %v682
  %v684 = vand.u32 %v634, 4294901760
  %v685 = vsub.f32 %v634, %v684
  %v686 = vand.u32 %v685, 4294901760
  %v687 = vsub.f32 %v685, %v686
  %v688 = vand.u32 %v687, 4294901760
  %689 = vmatmul.f32.gmra.mxu0 %v688
  %v690 = vpop.f32.mrf.mxu0
  %v691 = vadd.f32 0.0, %v690
  %v692 = vand.u32 %v635, 4294901760
  %v693 = vsub.f32 %v635, %v692
  %v694 = vand.u32 %v693, 4294901760
  %v695 = vsub.f32 %v693, %v694
  %v696 = vand.u32 %v695, 4294901760
  %697 = vmatmul.f32.gmra.mxu0 %v696
  %v698 = vpop.f32.mrf.mxu0
  %v699 = vadd.f32 0.0, %v698
  %700 = vdwg.mxu0
  %v701 = vand.u32 %v651, 4294901760
  %v702 = vsub.f32 %v651, %v701
  %v703 = vand.u32 %v702, 4294901760
  %v704 = vsub.f32 %v702, %v703
  %v705 = vand.u32 %v704, 4294901760
  %706 = vmatpush.msra.mxu0 %v705
  %v707 = vand.u32 %v650, 4294901760
  %v708 = vsub.f32 %v650, %v707
  %v709 = vand.u32 %v708, 4294901760
  %v710 = vsub.f32 %v708, %v709
  %v711 = vand.u32 %v710, 4294901760
  %712 = vmatpush.msra.mxu0 %v711
  %v713 = vand.u32 %v649, 4294901760
  %v714 = vsub.f32 %v649, %v713
  %v715 = vand.u32 %v714, 4294901760
  %v716 = vsub.f32 %v714, %v715
  %v717 = vand.u32 %v716, 4294901760
  %718 = vmatpush.msra.mxu0 %v717
  %v719 = vand.u32 %v648, 4294901760
  %v720 = vsub.f32 %v648, %v719
  %v721 = vand.u32 %v720, 4294901760
  %v722 = vsub.f32 %v720, %v721
  %v723 = vand.u32 %v722, 4294901760
  %724 = vmatpush.msra.mxu0 %v723
  %v725 = vand.u32 %v647, 4294901760
  %v726 = vsub.f32 %v647, %v725
  %v727 = vand.u32 %v726, 4294901760
  %v728 = vsub.f32 %v726, %v727
  %v729 = vand.u32 %v728, 4294901760
  %730 = vmatpush.msra.mxu0 %v729
  %v731 = vand.u32 %v646, 4294901760
  %v732 = vsub.f32 %v646, %v731
  %v733 = vand.u32 %v732, 4294901760
  %v734 = vsub.f32 %v732, %v733
  %v735 = vand.u32 %v734, 4294901760
  %736 = vmatpush.msra.mxu0 %v735
  %v737 = vand.u32 %v645, 4294901760
  %v738 = vsub.f32 %v645, %v737
  %v739 = vand.u32 %v738, 4294901760
  %v740 = vsub.f32 %v738, %v739
  %v741 = vand.u32 %v740, 4294901760
  %742 = vmatpush.msra.mxu0 %v741
  %v743 = vand.u32 %v644, 4294901760
  %v744 = vsub.f32 %v644, %v743
  %v745 = vand.u32 %v744, 4294901760
  %v746 = vsub.f32 %v744, %v745
  %v747 = vand.u32 %v746, 4294901760
  %748 = vmatpush.msra.mxu0 %v747
  %v749 = vand.u32 %v643, 4294901760
  %v750 = vsub.f32 %v643, %v749
  %v751 = vand.u32 %v750, 4294901760
  %v752 = vsub.f32 %v750, %v751
  %v753 = vand.u32 %v752, 4294901760
  %754 = vmatpush.msra.mxu0 %v753
  %v755 = vand.u32 %v642, 4294901760
  %v756 = vsub.f32 %v642, %v755
  %v757 = vand.u32 %v756, 4294901760
  %v758 = vsub.f32 %v756, %v757
  %v759 = vand.u32 %v758, 4294901760
  %760 = vmatpush.msra.mxu0 %v759
  %v761 = vand.u32 %v641, 4294901760
  %v762 = vsub.f32 %v641, %v761
  %v763 = vand.u32 %v762, 4294901760
  %v764 = vsub.f32 %v762, %v763
  %v765 = vand.u32 %v764, 4294901760
  %766 = vmatpush.msra.mxu0 %v765
  %v767 = vand.u32 %v640, 4294901760
  %v768 = vsub.f32 %v640, %v767
  %v769 = vand.u32 %v768, 4294901760
  %v770 = vsub.f32 %v768, %v769
  %v771 = vand.u32 %v770, 4294901760
  %772 = vmatpush.msra.mxu0 %v771
  %v773 = vand.u32 %v639, 4294901760
  %v774 = vsub.f32 %v639, %v773
  %v775 = vand.u32 %v774, 4294901760
  %v776 = vsub.f32 %v774, %v775
  %v777 = vand.u32 %v776, 4294901760
  %778 = vmatpush.msra.mxu0 %v777
  %v779 = vand.u32 %v638, 4294901760
  %v780 = vsub.f32 %v638, %v779
  %v781 = vand.u32 %v780, 4294901760
  %v782 = vsub.f32 %v780, %v781
  %v783 = vand.u32 %v782, 4294901760
  %784 = vmatpush.msra.mxu0 %v783
  %v785 = vand.u32 %v637, 4294901760
  %v786 = vsub.f32 %v637, %v785
  %v787 = vand.u32 %v786, 4294901760
  %v788 = vsub.f32 %v786, %v787
  %v789 = vand.u32 %v788, 4294901760
  %790 = vmatpush.msra.mxu0 %v789
  %v791 = vand.u32 %v636, 4294901760
  %v792 = vsub.f32 %v636, %v791
  %v793 = vand.u32 %v792, 4294901760
  %v794 = vsub.f32 %v792, %v793
  %v795 = vand.u32 %v794, 4294901760
  %796 = vmatpush.msra.mxu0 %v795
  %v797 = vand.u32 %v634, 4294901760
  %798 = vmatmul.f32.gmra.mxu0 %v797
  %v799 = vpop.f32.mrf.mxu0
  %v800 = vadd.f32 %v691, %v799
  %v801 = vand.u32 %v635, 4294901760
  %802 = vmatmul.f32.gmra.mxu0 %v801
  %v803 = vpop.f32.mrf.mxu0
  %v804 = vadd.f32 %v699, %v803
  %805 = vdwg.mxu0
  %v806 = vand.u32 %v651, 4294901760
  %v807 = vsub.f32 %v651, %v806
  %808 = vmatpush.msra.mxu0 %v807
  %v809 = vand.u32 %v650, 4294901760
  %v810 = vsub.f32 %v650, %v809
  %811 = vmatpush.msra.mxu0 %v810
  %v812 = vand.u32 %v649, 4294901760
  %v813 = vsub.f32 %v649, %v812
  %814 = vmatpush.msra.mxu0 %v813
  %v815 = vand.u32 %v648, 4294901760
  %v816 = vsub.f32 %v648, %v815
  %817 = vmatpush.msra.mxu0 %v816
  %v818 = vand.u32 %v647, 4294901760
  %v819 = vsub.f32 %v647, %v818
  %820 = vmatpush.msra.mxu0 %v819
  %v821 = vand.u32 %v646, 4294901760
  %v822 = vsub.f32 %v646, %v821
  %823 = vmatpush.msra.mxu0 %v822
  %v824 = vand.u32 %v645, 4294901760
  %v825 = vsub.f32 %v645, %v824
  %826 = vmatpush.msra.mxu0 %v825
  %v827 = vand.u32 %v644, 4294901760
  %v828 = vsub.f32 %v644, %v827
  %829 = vmatpush.msra.mxu0 %v828
  %v830 = vand.u32 %v643, 4294901760
  %v831 = vsub.f32 %v643, %v830
  %832 = vmatpush.msra.mxu0 %v831
  %v833 = vand.u32 %v642, 4294901760
  %v834 = vsub.f32 %v642, %v833
  %835 = vmatpush.msra.mxu0 %v834
  %v836 = vand.u32 %v641, 4294901760
  %v837 = vsub.f32 %v641, %v836
  %838 = vmatpush.msra.mxu0 %v837
  %v839 = vand.u32 %v640, 4294901760
  %v840 = vsub.f32 %v640, %v839
  %841 = vmatpush.msra.mxu0 %v840
  %v842 = vand.u32 %v639, 4294901760
  %v843 = vsub.f32 %v639, %v842
  %844 = vmatpush.msra.mxu0 %v843
  %v845 = vand.u32 %v638, 4294901760
  %v846 = vsub.f32 %v638, %v845
  %847 = vmatpush.msra.mxu0 %v846
  %v848 = vand.u32 %v637, 4294901760
  %v849 = vsub.f32 %v637, %v848
  %850 = vmatpush.msra.mxu0 %v849
  %v851 = vand.u32 %v636, 4294901760
  %v852 = vsub.f32 %v636, %v851
  %853 = vmatpush.msra.mxu0 %v852
  %v854 = vand.u32 %v634, 4294901760
  %v855 = vsub.f32 %v634, %v854
  %856 = vmatmul.f32.gmra.mxu0 %v855
  %v857 = vpop.f32.mrf.mxu0
  %v858 = vadd.f32 %v800, %v857
  %v859 = vand.u32 %v635, 4294901760
  %v860 = vsub.f32 %v635, %v859
  %861 = vmatmul.f32.gmra.mxu0 %v860
  %v862 = vpop.f32.mrf.mxu0
  %v863 = vadd.f32 %v804, %v862
  %864 = vdwg.mxu0
  %v865 = vand.u32 %v651, 4294901760
  %866 = vmatpush.msra.mxu0 %v865
  %v867 = vand.u32 %v650, 4294901760
  %868 = vmatpush.msra.mxu0 %v867
  %v869 = vand.u32 %v649, 4294901760
  %870 = vmatpush.msra.mxu0 %v869
  %v871 = vand.u32 %v648, 4294901760
  %872 = vmatpush.msra.mxu0 %v871
  %v873 = vand.u32 %v647, 4294901760
  %874 = vmatpush.msra.mxu0 %v873
  %v875 = vand.u32 %v646, 4294901760
  %876 = vmatpush.msra.mxu0 %v875
  %v877 = vand.u32 %v645, 4294901760
  %878 = vmatpush.msra.mxu0 %v877
  %v879 = vand.u32 %v644, 4294901760
  %880 = vmatpush.msra.mxu0 %v879
  %v881 = vand.u32 %v643, 4294901760
  %882 = vmatpush.msra.mxu0 %v881
  %v883 = vand.u32 %v642, 4294901760
  %884 = vmatpush.msra.mxu0 %v883
  %v885 = vand.u32 %v641, 4294901760
  %886 = vmatpush.msra.mxu0 %v885
  %v887 = vand.u32 %v640, 4294901760
  %888 = vmatpush.msra.mxu0 %v887
  %v889 = vand.u32 %v639, 4294901760
  %890 = vmatpush.msra.mxu0 %v889
  %v891 = vand.u32 %v638, 4294901760
  %892 = vmatpush.msra.mxu0 %v891
  %v893 = vand.u32 %v637, 4294901760
  %894 = vmatpush.msra.mxu0 %v893
  %v895 = vand.u32 %v636, 4294901760
  %896 = vmatpush.msra.mxu0 %v895
  %v897 = vand.u32 %v634, 4294901760
  %v898 = vsub.f32 %v634, %v897
  %v899 = vand.u32 %v898, 4294901760
  %900 = vmatmul.f32.gmra.mxu0 %v899
  %v901 = vpop.f32.mrf.mxu0
  %v902 = vadd.f32 %v858, %v901
  %v903 = vand.u32 %v635, 4294901760
  %v904 = vsub.f32 %v635, %v903
  %v905 = vand.u32 %v904, 4294901760
  %906 = vmatmul.f32.gmra.mxu0 %v905
  %v907 = vpop.f32.mrf.mxu0
  %v908 = vadd.f32 %v863, %v907
  %909 = vdwg.mxu0
  %v910 = vand.u32 %v651, 4294901760
  %v911 = vsub.f32 %v651, %v910
  %v912 = vand.u32 %v911, 4294901760
  %913 = vmatpush.msra.mxu0 %v912
  %v914 = vand.u32 %v650, 4294901760
  %v915 = vsub.f32 %v650, %v914
  %v916 = vand.u32 %v915, 4294901760
  %917 = vmatpush.msra.mxu0 %v916
  %v918 = vand.u32 %v649, 4294901760
  %v919 = vsub.f32 %v649, %v918
  %v920 = vand.u32 %v919, 4294901760
  %921 = vmatpush.msra.mxu0 %v920
  %v922 = vand.u32 %v648, 4294901760
  %v923 = vsub.f32 %v648, %v922
  %v924 = vand.u32 %v923, 4294901760
  %925 = vmatpush.msra.mxu0 %v924
  %v926 = vand.u32 %v647, 4294901760
  %v927 = vsub.f32 %v647, %v926
  %v928 = vand.u32 %v927, 4294901760
  %929 = vmatpush.msra.mxu0 %v928
  %v930 = vand.u32 %v646, 4294901760
  %v931 = vsub.f32 %v646, %v930
  %v932 = vand.u32 %v931, 4294901760
  %933 = vmatpush.msra.mxu0 %v932
  %v934 = vand.u32 %v645, 4294901760
  %v935 = vsub.f32 %v645, %v934
  %v936 = vand.u32 %v935, 4294901760
  %937 = vmatpush.msra.mxu0 %v936
  %v938 = vand.u32 %v644, 4294901760
  %v939 = vsub.f32 %v644, %v938
  %v940 = vand.u32 %v939, 4294901760
  %941 = vmatpush.msra.mxu0 %v940
  %v942 = vand.u32 %v643, 4294901760
  %v943 = vsub.f32 %v643, %v942
  %v944 = vand.u32 %v943, 4294901760
  %945 = vmatpush.msra.mxu0 %v944
  %v946 = vand.u32 %v642, 4294901760
  %v947 = vsub.f32 %v642, %v946
  %v948 = vand.u32 %v947, 4294901760
  %949 = vmatpush.msra.mxu0 %v948
  %v950 = vand.u32 %v641, 4294901760
  %v951 = vsub.f32 %v641, %v950
  %v952 = vand.u32 %v951, 4294901760
  %953 = vmatpush.msra.mxu0 %v952
  %v954 = vand.u32 %v640, 4294901760
  %v955 = vsub.f32 %v640, %v954
  %v956 = vand.u32 %v955, 4294901760
  %957 = vmatpush.msra.mxu0 %v956
  %v958 = vand.u32 %v639, 4294901760
  %v959 = vsub.f32 %v639, %v958
  %v960 = vand.u32 %v959, 4294901760
  %961 = vmatpush.msra.mxu0 %v960
  %v962 = vand.u32 %v638, 4294901760
  %v963 = vsub.f32 %v638, %v962
  %v964 = vand.u32 %v963, 4294901760
  %965 = vmatpush.msra.mxu0 %v964
  %v966 = vand.u32 %v637, 4294901760
  %v967 = vsub.f32 %v637, %v966
  %v968 = vand.u32 %v967, 4294901760
  %969 = vmatpush.msra.mxu0 %v968
  %v970 = vand.u32 %v636, 4294901760
  %v971 = vsub.f32 %v636, %v970
  %v972 = vand.u32 %v971, 4294901760
  %973 = vmatpush.msra.mxu0 %v972
  %v974 = vand.u32 %v634, 4294901760
  %975 = vmatmul.f32.gmra.mxu0 %v974
  %v976 = vpop.f32.mrf.mxu0
  %v977 = vadd.f32 %v902, %v976
  %v978 = vand.u32 %v635, 4294901760
  %979 = vmatmul.f32.gmra.mxu0 %v978
  %v980 = vpop.f32.mrf.mxu0
  %v981 = vadd.f32 %v908, %v980
  %982 = vdwg.mxu0
  %v983 = vand.u32 %v651, 4294901760
  %984 = vmatpush.msra.mxu0 %v983
  %v985 = vand.u32 %v650, 4294901760
  %986 = vmatpush.msra.mxu0 %v985
  %v987 = vand.u32 %v649, 4294901760
  %988 = vmatpush.msra.mxu0 %v987
  %v989 = vand.u32 %v648, 4294901760
  %990 = vmatpush.msra.mxu0 %v989
  %v991 = vand.u32 %v647, 4294901760
  %992 = vmatpush.msra.mxu0 %v991
  %v993 = vand.u32 %v646, 4294901760
  %994 = vmatpush.msra.mxu0 %v993
  %v995 = vand.u32 %v645, 4294901760
  %996 = vmatpush.msra.mxu0 %v995
  %v997 = vand.u32 %v644, 4294901760
  %998 = vmatpush.msra.mxu0 %v997
  %v999 = vand.u32 %v643, 4294901760
  %1000 = vmatpush.msra.mxu0 %v999
  %v1001 = vand.u32 %v642, 4294901760
  %1002 = vmatpush.msra.mxu0 %v1001
  %v1003 = vand.u32 %v641, 4294901760
  %1004 = vmatpush.msra.mxu0 %v1003
  %v1005 = vand.u32 %v640, 4294901760
  %1006 = vmatpush.msra.mxu0 %v1005
  %v1007 = vand.u32 %v639, 4294901760
  %1008 = vmatpush.msra.mxu0 %v1007
  %v1009 = vand.u32 %v638, 4294901760
  %1010 = vmatpush.msra.mxu0 %v1009
  %v1011 = vand.u32 %v637, 4294901760
  %1012 = vmatpush.msra.mxu0 %v1011
  %v1013 = vand.u32 %v636, 4294901760
  %1014 = vmatpush.msra.mxu0 %v1013
  %v1015 = vand.u32 %v634, 4294901760
  %1016 = vmatmul.f32.gmra.mxu0 %v1015
  %v1017 = vpop.f32.mrf.mxu0
  %v1018 = vadd.f32 %v977, %v1017
  %v1019 = vand.u32 %v635, 4294901760
  %1020 = vmatmul.f32.gmra.mxu0 %v1019
  %v1021 = vpop.f32.mrf.mxu0
  %v1022 = vadd.f32 %v981, %v1021
  %1023 = vdwg.mxu0
  %1024 = vst.msk [vmem:[%s8] sm:$0xff] %vm50, %v1018
  %1025 = vst.msk [vmem:[%s8 + $0x8] sm:$0xff] %vm50, %v1022
  // Predicated region
  $region34: #{tpu_custom_call.1} parent=0 // pred_check
    _
  $region35: #{tpu_custom_call.1} parent=0 // pred_check_branch
    %1027 = sbr.rel (0) target = $region37
  $region36: #{tpu_custom_call.1} parent=0 // pred_region
    _
  $region37: #{tpu_custom_call.1} parent=0 // pred_fallthru
    _
  // Predicated region
  $region38: #{tpu_custom_call.1} parent=0 // pred_check
    _
  $region39: #{tpu_custom_call.1} parent=0 // pred_check_branch
    %1029 = sbr.rel (0) target = $region41
  $region40: #{tpu_custom_call.1} parent=0 // pred_region
    _
  $region41: #{tpu_custom_call.1} parent=0 // pred_fallthru
    _

</llo_original>
